<compile_context>
chip_gen: v6e
topology: v6e:2x2x1
jax: 0.10.0
libtpu: 0.0.40
codegen_flags: <defaults>
</compile_context>

<pallas_src>
import functools

import jax
import jax.numpy as jnp
from jax.experimental import pallas as pl
from jax.experimental.pallas import tpu as pltpu

ALPHA = 0.2     # leaky-relu negative slope (GAT alpha)
V = 1.0         # student-t degrees of freedom


def _vmem_capacity_bytes():
    try:
        info = pltpu.get_tpu_info()
        cap = getattr(info, "vmem_capacity_bytes", None)
        if cap:
            return int(cap)
    except Exception:
        pass
    return 64 * 1024 * 1024  # conservative default (v7x per-TC VMEM)


_VMEM_CAP = _vmem_capacity_bytes()
# leave headroom for compiler scratch / double-buffering bookkeeping
_VMEM_LIMIT = int(_VMEM_CAP * 0.8)


def _pick_tile(n_pad, vmem_cap):
    """Largest row tile in {512,256,128} whose attention working set fits."""
    budget = int(vmem_cap * 0.6)
    # per row of the attention tile: double-buffered adj(int8)+M(bf16) streams
    # (2 * 3 B) plus ~4-5 live f32 (tq, N) temporaries  ->  ~24 B / element
    bytes_per_row = 24 * n_pad
    for tq in (512, 256, 128):
        if n_pad % tq == 0 and tq * bytes_per_row <= budget:
            return tq
    return 128


# ----------------------------------------------------------------------------
# per-layer prep (row-tiled): h = x @ W, attention scores as VPU reductions
# ----------------------------------------------------------------------------
def _gat_prep_kernel(x_ref, w_ref, a_s_ref, a_n_ref, h_ref, ss_ref, sn_ref):
    h = jnp.dot(x_ref[...].astype(jnp.float32), w_ref[...],
                preferred_element_type=jnp.float32)
    # a_s / a_n are (1, F_out) rows -> pure VPU reductions, no (H,1) matmul
    ss_ref[...] = jnp.sum(h * a_s_ref[...], axis=1, keepdims=True)   # (tq, 1)
    sn_ref[...] = jnp.sum(h * a_n_ref[...], axis=1, keepdims=True)   # (tq, 1)
    # h only feeds the MXU aggregation att @ h -> store bf16
    h_ref[...] = h.astype(jnp.bfloat16)


def _gat_prep(x, w, a_self, a_neigh, tq):
    n, f_in = x.shape
    f_out = w.shape[1]
    return pl.pallas_call(
        _gat_prep_kernel,
        out_shape=(
            jax.ShapeDtypeStruct((n, f_out), jnp.bfloat16),   # h
            jax.ShapeDtypeStruct((n, 1), jnp.float32),        # self scores
            jax.ShapeDtypeStruct((n, 1), jnp.float32),        # neighbor scores
        ),
        grid=(n // tq,),
        in_specs=[
            pl.BlockSpec((tq, f_in), lambda i: (i, 0)),       # x row tile
            pl.BlockSpec((f_in, f_out), lambda i: (0, 0)),    # W resident
            pl.BlockSpec((1, f_out), lambda i: (0, 0)),       # a_self row
            pl.BlockSpec((1, f_out), lambda i: (0, 0)),       # a_neigh row
        ],
        out_specs=(
            pl.BlockSpec((tq, f_out), lambda i: (i, 0)),
            pl.BlockSpec((tq, 1), lambda i: (i, 0)),
            pl.BlockSpec((tq, 1), lambda i: (i, 0)),
        ),
        compiler_params=pltpu.CompilerParams(
            dimension_semantics=("parallel",),
            vmem_limit_bytes=_VMEM_LIMIT),
    )(x, w, a_self.T, a_neigh.T)


# ----------------------------------------------------------------------------
# row-tiled GAT attention + aggregation (+ optional fused L2 normalize)
# adj arrives as an int8 0/1 mask, M as bf16; softmax denom folded into output
# ----------------------------------------------------------------------------
def _gat_attn_kernel(adj_ref, m_ref, h_ref, ss_ref, sn_ref, out_ref, *, normalize):
    m01 = adj_ref[...].astype(jnp.float32)                 # 0/1 edge mask
    attn = ss_ref[...] + sn_ref[...]                       # (tq,1)+(1,N)
    attn = attn * m_ref[...].astype(jnp.float32)           # proximity weighting
    attn = jnp.where(attn > 0, attn, ALPHA * attn)         # leaky relu
    # masked, numerically-stable softmax with multiplicative masking:
    # rowmax over attn*mask upper-bounds the edge logits (non-edges give 0),
    # the additive constant cancels after normalization.
    rowmax = jnp.max(attn * m01, axis=1, keepdims=True)
    e = jnp.exp(attn - rowmax) * m01
    denom = jnp.maximum(jnp.sum(e, axis=1, keepdims=True), jnp.float32(1e-20))
    # aggregate un-normalized (bf16 MXU operands, f32 accumulate), then fold
    # the softmax denominator into the small (tq, F_out) output tile.
    hp = jnp.dot(e.astype(jnp.bfloat16), h_ref[...],
                 preferred_element_type=jnp.float32)
    hp = hp * pl.reciprocal(denom, approx=True)
    out = jnp.where(hp > 0, hp, jnp.exp(jnp.minimum(hp, 0.0)) - 1.0)   # ELU
    if normalize:                                          # F.normalize(dim=1)
        nrm = jnp.sqrt(jnp.sum(out * out, axis=1, keepdims=True))
        out = out / jnp.maximum(nrm, jnp.float32(1e-12))
    out_ref[...] = out.astype(out_ref.dtype)


def _gat_attention(adj_mask, m, h, s_self, s_neigh_row, tq, normalize, out_dtype):
    n = adj_mask.shape[0]
    f_out = h.shape[1]
    out_bytes = 4 if out_dtype == jnp.float32 else 2
    kernel = functools.partial(_gat_attn_kernel, normalize=normalize)
    cost = pl.CostEstimate(
        flops=2 * n * n * f_out + 8 * n * n,
        transcendentals=n * n,
        bytes_accessed=n * n * 3 + n * f_out * (2 + out_bytes) + n * 12,
    )
    return pl.pallas_call(
        kernel,
        out_shape=jax.ShapeDtypeStruct((n, f_out), out_dtype),
        grid=(n // tq,),
        in_specs=[
            pl.BlockSpec((tq, n), lambda i: (i, 0)),        # adj mask tile (int8)
            pl.BlockSpec((tq, n), lambda i: (i, 0)),        # M tile (bf16)
            pl.BlockSpec((n, f_out), lambda i: (0, 0)),     # h (resident, bf16)
            pl.BlockSpec((tq, 1), lambda i: (i, 0)),        # self scores tile
            pl.BlockSpec((1, n), lambda i: (0, 0)),         # neighbor score row
        ],
        out_specs=pl.BlockSpec((tq, f_out), lambda i: (i, 0)),
        compiler_params=pltpu.CompilerParams(
            dimension_semantics=("parallel",),
            vmem_limit_bytes=_VMEM_LIMIT),
        cost_estimate=cost,
    )(adj_mask, m, h, s_self, s_neigh_row)


# ----------------------------------------------------------------------------
# row-tiled decoder: A_pred = sigmoid(z z^T) (bf16 out), q = student-t soft
# assignment (exact f32)
# ----------------------------------------------------------------------------
def _decoder_kernel(zt_ref, zf_ref, cl_ref, c2_ref, apred_ref, q_ref):
    zt = zt_ref[...]                                      # (tq, E) f32
    # A_pred tile: NT dot_general (contract last axes), bf16 MXU operands
    logits = jax.lax.dot_general(
        zt.astype(jnp.bfloat16), zf_ref[...],
        dimension_numbers=(((1,), (1,)), ((), ())),
        preferred_element_type=jnp.float32)               # (tq, N)
    apred = pl.reciprocal(1.0 + jnp.exp(-logits), approx=True)
    apred_ref[...] = apred.astype(apred_ref.dtype)        # bf16 write (half HBM)
    # get_Q with v = 1:  q = 1 / (1 + ||z - c||^2 / v), exact row-normalized
    cl = cl_ref[...]                                      # (K, E)
    z2 = jnp.sum(zt * zt, axis=1, keepdims=True)          # (tq, 1)
    cross = jax.lax.dot_general(                          # (tq, K), exact f32
        zt, cl, dimension_numbers=(((1,), (1,)), ((), ())),
        preferred_element_type=jnp.float32)
    d2 = jnp.maximum(z2 + c2_ref[...] - 2.0 * cross, 0.0)
    q = 1.0 / (1.0 + d2 / V)
    q_ref[...] = q / jnp.sum(q, axis=1, keepdims=True)


def _decoder(z, cluster, tq):
    n, e = z.shape
    k = cluster.shape[0]
    z_bf16 = z.astype(jnp.bfloat16)                       # cast once, resident operand
    c2_row = jnp.sum(cluster * cluster, axis=1)[None, :]  # (1, K)
    cost = pl.CostEstimate(
        flops=2 * n * n * e + 2 * n * k * e + 4 * n * n,
        transcendentals=n * n,
        bytes_accessed=n * n * 2 + n * e * 6 + n * k * 4 + k * e * 4,
    )
    return pl.pallas_call(
        _decoder_kernel,
        out_shape=(
            jax.ShapeDtypeStruct((n, n), jnp.bfloat16),   # A_pred (bf16)
            jax.ShapeDtypeStruct((n, k), jnp.float32),    # q
        ),
        grid=(n // tq,),
        in_specs=[
            pl.BlockSpec((tq, e), lambda i: (i, 0)),      # z row tile (f32)
            pl.BlockSpec((n, e), lambda i: (0, 0)),       # z (resident, bf16)
            pl.BlockSpec((k, e), lambda i: (0, 0)),       # cluster centers
            pl.BlockSpec((1, k), lambda i: (0, 0)),       # ||c||^2 row
        ],
        out_specs=(
            pl.BlockSpec((tq, n), lambda i: (i, 0)),
            pl.BlockSpec((tq, k), lambda i: (i, 0)),
        ),
        compiler_params=pltpu.CompilerParams(
            dimension_semantics=("parallel",),
            vmem_limit_bytes=_VMEM_LIMIT),
        cost_estimate=cost,
    )(z, z_bf16, cluster, c2_row)


# ----------------------------------------------------------------------------
# full forward
# ----------------------------------------------------------------------------
def daegc_forward(x, adj, M, params):
    """Returns (A_pred, z, q) = DAEGC.forward(x, adj, M). A_pred is bf16."""
    n = x.shape[0]
    # pad node axis to a lane-friendly multiple of 128; padded rows have zero
    # features / no edges, and their outputs are sliced off below.
    n_pad = ((n + 127) // 128) * 128
    if n_pad != n:
        p = n_pad - n
        x = jnp.pad(x, ((0, p), (0, 0)))
        adj = jnp.pad(adj, ((0, p), (0, p)))
        M = jnp.pad(M, ((0, p), (0, p)))
    # downcast the two N^2 streams once: adj -> int8 edge mask, M -> bf16
    adj_mask = (adj > 0).astype(jnp.int8)
    m_bf16 = M.astype(jnp.bfloat16)
    tq = _pick_tile(n_pad, _VMEM_CAP)

    # GAT layer 1 (hidden output kept bf16: it only feeds layer-2's matmul)
    h1l, s1s, s1n = _gat_prep(x, params["W1"], params["a1_self"],
                              params["a1_neigh"], tq)
    h1 = _gat_attention(adj_mask, m_bf16, h1l, s1s, s1n.reshape(1, n_pad), tq,
                        normalize=False, out_dtype=jnp.bfloat16)
    # GAT layer 2 (L2 row-normalize fused) -> z (f32)
    h2l, s2s, s2n = _gat_prep(h1, params["W2"], params["a2_self"],
                              params["a2_neigh"], tq)
    z = _gat_attention(adj_mask, m_bf16, h2l, s2s, s2n.reshape(1, n_pad), tq,
                       normalize=True, out_dtype=jnp.float32)
    # dot-product decoder + soft cluster assignment
    A_pred, q = _decoder(z, params["cluster"], tq)

    return A_pred[:n, :n], z[:n], q[:n]


def _xavier_uniform(key, shape, gain=1.0):
    fan_in, fan_out = shape[0], shape[1]
    bound = gain * jnp.sqrt(6.0 / (fan_in + fan_out))
    return jax.random.uniform(key, shape, jnp.float32, -bound, bound)


def _xavier_normal(key, shape, gain=1.0):
    fan_in, fan_out = shape[0], shape[1]
    std = gain * jnp.sqrt(2.0 / (fan_in + fan_out))
    return std * jax.random.normal(key, shape, jnp.float32)


if __name__ == "__main__":
    # small problem consistent with the module's forward
    N, F_IN, H, E, K = 256, 64, 32, 16, 4
    gain = 1.414  # as in GATLayer init

    key = jax.random.PRNGKey(0)
    keys = jax.random.split(key, 10)

    # node features
    x = jax.random.normal(keys[0], (N, F_IN), jnp.float32)

    # symmetric binary adjacency with self-loops
    a_rand = jax.random.uniform(keys[1], (N, N))
    adj = (a_rand < 0.05).astype(jnp.float32)
    adj = jnp.maximum(adj, adj.T)
    adj = jnp.maximum(adj, jnp.eye(N, dtype=jnp.float32))

    # proximity matrix M (row-normalized 2-hop transition, as DAEGC preprocessing)
    deg = jnp.sum(adj, axis=1, keepdims=True)
    tran = adj / deg
    M = (tran + tran @ tran) / 2.0

    params = {
        "W1": _xavier_uniform(keys[2], (F_IN, H), gain),
        "a1_self": _xavier_uniform(keys[3], (H, 1), gain),
        "a1_neigh": _xavier_uniform(keys[4], (H, 1), gain),
        "W2": _xavier_uniform(keys[5], (H, E), gain),
        "a2_self": _xavier_uniform(keys[6], (E, 1), gain),
        "a2_neigh": _xavier_uniform(keys[7], (E, 1), gain),
        "cluster": _xavier_normal(keys[8], (K, E)),
    }

    A_pred, z, q = daegc_forward(x, adj, M, params)
    jax.block_until_ready((A_pred, z, q))

    assert A_pred.shape == (N, N) and z.shape == (N, E) and q.shape == (N, K)
    assert bool(jnp.all(jnp.isfinite(A_pred.astype(jnp.float32))))
    assert bool(jnp.all(jnp.isfinite(z)))
    assert bool(jnp.all(jnp.isfinite(q)))
    # q rows sum to 1 (exact normalization kept in-kernel)
    assert bool(jnp.allclose(jnp.sum(q, axis=1), 1.0, atol=1e-5))
    # z rows are (approximately) unit-norm
    assert bool(jnp.allclose(jnp.sum(z * z, axis=1), 1.0, atol=1e-3))
    print("KERNEL_OK")
</pallas_src>

<mosaic_0001>
module attributes {stable_mosaic.version = 11 : i64} {
  func.func @_gat_prep_kernel(%arg0: i32, %arg1: memref<256x64xf32, #tpu.memory_space<vmem>>, %arg2: memref<64x32xf32, #tpu.memory_space<vmem>>, %arg3: memref<1x32xf32, #tpu.memory_space<vmem>>, %arg4: memref<1x32xf32, #tpu.memory_space<vmem>>, %arg5: memref<256x32xbf16, #tpu.memory_space<vmem>>, %arg6: memref<256x1xf32, #tpu.memory_space<vmem>>, %arg7: memref<256x1xf32, #tpu.memory_space<vmem>>) attributes {dimension_semantics = [#tpu.dimension_semantics<parallel>], iteration_bounds = array<i64: 1>, scalar_prefetch = 0 : i64, scratch_operands = 0 : i64, tpu.core_type = #tpu.core_type<tc>, window_params = [{transform_indices = @transform_0, window_bounds = array<i64: 256, 64>}, {pipeline_mode = #tpu.pipeline_mode<synchronous>, transform_indices = @transform_1, window_bounds = array<i64: 64, 32>}, {pipeline_mode = #tpu.pipeline_mode<synchronous>, transform_indices = @transform_2, window_bounds = array<i64: 1, 32>}, {pipeline_mode = #tpu.pipeline_mode<synchronous>, transform_indices = @transform_3, window_bounds = array<i64: 1, 32>}, {transform_indices = @transform_4, window_bounds = array<i64: 256, 32>}, {transform_indices = @transform_5, window_bounds = array<i64: 256, 1>}, {transform_indices = @transform_6, window_bounds = array<i64: 256, 1>}]} {
    %c0 = arith.constant 0 : index
    %c0_0 = arith.constant 0 : index
    %0 = vector.load %arg1[%c0, %c0_0] : memref<256x64xf32, #tpu.memory_space<vmem>>, vector<256x64xf32>
    %c0_1 = arith.constant 0 : index
    %c0_2 = arith.constant 0 : index
    %1 = vector.load %arg2[%c0_1, %c0_2] : memref<64x32xf32, #tpu.memory_space<vmem>>, vector<64x32xf32>
    %cst = arith.constant dense<0.000000e+00> : vector<256x32xf32>
    %2 = tpu.matmul %0, %1, %cst {dimension_numbers = #tpu.dot_dimension_numbers<[1], [0], [0], [1], [0, 0, 1, 1], [], []>} : vector<256x64xf32>, vector<64x32xf32>, vector<256x32xf32> -> vector<256x32xf32>
    %c0_3 = arith.constant 0 : index
    %c0_4 = arith.constant 0 : index
    %3 = vector.load %arg3[%c0_3, %c0_4] : memref<1x32xf32, #tpu.memory_space<vmem>>, vector<1x32xf32>
    %4 = vector.broadcast %3 : vector<1x32xf32> to vector<256x32xf32>
    %5 = arith.mulf %2, %4 : vector<256x32xf32>
    %cst_5 = arith.constant dense<0.000000e+00> : vector<256xf32>
    %6 = vector.multi_reduction <add>, %5, %cst_5 [1] : vector<256x32xf32> to vector<256xf32>
    %7 = vector.shape_cast %6 : vector<256xf32> to vector<256x1xf32>
    %c0_6 = arith.constant 0 : index
    %c0_7 = arith.constant 0 : index
    %8 = vector.load %arg6[%c0_6, %c0_7] : memref<256x1xf32, #tpu.memory_space<vmem>>, vector<256x1xf32>
    tpu.vector_store %arg6[%c0_6, %c0_7], %7 {strides = array<i32>} : memref<256x1xf32, #tpu.memory_space<vmem>>, vector<256x1xf32>,
    %c0_8 = arith.constant 0 : index
    %c0_9 = arith.constant 0 : index
    %9 = vector.load %arg4[%c0_8, %c0_9] : memref<1x32xf32, #tpu.memory_space<vmem>>, vector<1x32xf32>
    %10 = vector.broadcast %9 : vector<1x32xf32> to vector<256x32xf32>
    %11 = arith.mulf %2, %10 : vector<256x32xf32>
    %cst_10 = arith.constant dense<0.000000e+00> : vector<256xf32>
    %12 = vector.multi_reduction <add>, %11, %cst_10 [1] : vector<256x32xf32> to vector<256xf32>
    %13 = vector.shape_cast %12 : vector<256xf32> to vector<256x1xf32>
    %c0_11 = arith.constant 0 : index
    %c0_12 = arith.constant 0 : index
    %14 = vector.load %arg7[%c0_11, %c0_12] : memref<256x1xf32, #tpu.memory_space<vmem>>, vector<256x1xf32>
    tpu.vector_store %arg7[%c0_11, %c0_12], %13 {strides = array<i32>} : memref<256x1xf32, #tpu.memory_space<vmem>>, vector<256x1xf32>,
    %15 = arith.truncf %2 : vector<256x32xf32> to vector<256x32xbf16>
    %c0_13 = arith.constant 0 : index
    %c0_14 = arith.constant 0 : index
    %16 = vector.load %arg5[%c0_13, %c0_14] : memref<256x32xbf16, #tpu.memory_space<vmem>>, vector<256x32xbf16>
    tpu.vector_store %arg5[%c0_13, %c0_14], %15 {strides = array<i32>} : memref<256x32xbf16, #tpu.memory_space<vmem>>, vector<256x32xbf16>,
    return
  }
  func.func @transform_0(%arg0: i32) -> (i32, i32) {
    %c0_i32 = arith.constant 0 : i32
    %c0_i32_0 = arith.constant 0 : i32
    return %arg0, %c0_i32 : i32, i32
  }
  func.func @transform_1(%arg0: i32) -> (i32, i32) {
    %c0_i32 = arith.constant 0 : i32
    %c0_i32_0 = arith.constant 0 : i32
    %c0_i32_1 = arith.constant 0 : i32
    return %c0_i32, %c0_i32_0 : i32, i32
  }
  func.func @transform_2(%arg0: i32) -> (i32, i32) {
    %c0_i32 = arith.constant 0 : i32
    %c0_i32_0 = arith.constant 0 : i32
    %c0_i32_1 = arith.constant 0 : i32
    return %c0_i32, %c0_i32_0 : i32, i32
  }
  func.func @transform_3(%arg0: i32) -> (i32, i32) {
    %c0_i32 = arith.constant 0 : i32
    %c0_i32_0 = arith.constant 0 : i32
    %c0_i32_1 = arith.constant 0 : i32
    return %c0_i32, %c0_i32_0 : i32, i32
  }
  func.func @transform_4(%arg0: i32) -> (i32, i32) {
    %c0_i32 = arith.constant 0 : i32
    %c0_i32_0 = arith.constant 0 : i32
    return %arg0, %c0_i32 : i32, i32
  }
  func.func @transform_5(%arg0: i32) -> (i32, i32) {
    %c0_i32 = arith.constant 0 : i32
    %c0_i32_0 = arith.constant 0 : i32
    return %arg0, %c0_i32 : i32, i32
  }
  func.func @transform_6(%arg0: i32) -> (i32, i32) {
    %c0_i32 = arith.constant 0 : i32
    %c0_i32_0 = arith.constant 0 : i32
    return %arg0, %c0_i32 : i32, i32
  }
}

</mosaic_0001>

<llo_original>
// kernel: tpu_custom_call.1
$region0: #{tpu_custom_call.1}
  #allocation0 [shape = 'u32[]', space=smem, size = 0x4, offset = 0x4, fixed_abs, tag = 'smem constant byte address 0x4 - core index']
  #allocation1 [shape = 'u32[144,128]{1,0:T(1,128)}', space=vmem, size = 0x12000, scoped, tag = 'internal scratch']
  %s0 = inlined_call_operand.vmem [shape: f32[256,64], index: 0, kind: input, shape index: {}]
  %s1 = inlined_call_operand.vmem [shape: f32[64,32], index: 1, kind: input, shape index: {}]
  %s2 = inlined_call_operand.vmem [shape: f32[1,32], index: 2, kind: input, shape index: {}]
  %s3 = inlined_call_operand.vmem [shape: f32[1,32], index: 3, kind: input, shape index: {}]
  %s4 = inlined_call_operand.vmem [shape: bf16[256,32], index: 4, kind: output, shape index: {0}]
  %s5 = inlined_call_operand.vmem [shape: f32[256,1], index: 5, kind: output, shape index: {1}]
  %s6 = inlined_call_operand.vmem [shape: f32[256,1], index: 6, kind: output, shape index: {2}]
  %7 = xla_tuple %s4, %s5, %s6
  %s8 = sld [smem:[#allocation0]]
  $region42: #{tpu_custom_call.1} parent=0
    _
  %s10 = ssub.s32 1, %s8
  %s11 = scalar_select 0, %s10, %s8
  // Predicated region
  $region2: #{tpu_custom_call.1} parent=0 // pred_check
    _
  $region3: #{tpu_custom_call.1} parent=0 // pred_check_branch
    %13 = sbr.rel (0) target = $region5
  $region4: #{tpu_custom_call.1} parent=0 // pred_region
    _
  $region5: #{tpu_custom_call.1} parent=0 // pred_fallthru
    _
  // Predicated region
  $region6: #{tpu_custom_call.1} parent=0 // pred_check
    _
  $region7: #{tpu_custom_call.1} parent=0 // pred_check_branch
    %15 = sbr.rel (0) target = $region9
  $region8: #{tpu_custom_call.1} parent=0 // pred_region
    _
  $region9: #{tpu_custom_call.1} parent=0 // pred_fallthru
    _
  // Predicated region
  $region10: #{tpu_custom_call.1} parent=0 // pred_check
    _
  $region11: #{tpu_custom_call.1} parent=0 // pred_check_branch
    %17 = sbr.rel (0) target = $region13
  $region12: #{tpu_custom_call.1} parent=0 // pred_region
    _
  $region13: #{tpu_custom_call.1} parent=0 // pred_fallthru
    _
  // Predicated region
  $region14: #{tpu_custom_call.1} parent=0 // pred_check
    _
  $region15: #{tpu_custom_call.1} parent=0 // pred_check_branch
    %19 = sbr.rel (0) target = $region17
  $region16: #{tpu_custom_call.1} parent=0 // pred_region
    _
  $region17: #{tpu_custom_call.1} parent=0 // pred_fallthru
    _
  %v20 = vld [vmem:[%s0] sm:$0xff]
  %v21 = vld [vmem:[%s0 + $0x8] sm:$0xff]
  %v22 = vld [vmem:[%s0 + $0x10] sm:$0xff]
  %v23 = vld [vmem:[%s0 + $0x18] sm:$0xff]
  %v24 = vld [vmem:[%s0 + $0x20] sm:$0xff]
  %v25 = vld [vmem:[%s0 + $0x28] sm:$0xff]
  %v26 = vld [vmem:[%s0 + $0x30] sm:$0xff]
  %v27 = vld [vmem:[%s0 + $0x38] sm:$0xff]
  %v28 = vld [vmem:[%s0 + $0x40] sm:$0xff]
  %v29 = vld [vmem:[%s0 + $0x48] sm:$0xff]
  %v30 = vld [vmem:[%s0 + $0x50] sm:$0xff]
  %v31 = vld [vmem:[%s0 + $0x58] sm:$0xff]
  %v32 = vld [vmem:[%s0 + $0x60] sm:$0xff]
  %v33 = vld [vmem:[%s0 + $0x68] sm:$0xff]
  %v34 = vld [vmem:[%s0 + $0x70] sm:$0xff]
  %v35 = vld [vmem:[%s0 + $0x78] sm:$0xff]
  %v36 = vld [vmem:[%s0 + $0x80] sm:$0xff]
  %v37 = vld [vmem:[%s0 + $0x88] sm:$0xff]
  %v38 = vld [vmem:[%s0 + $0x90] sm:$0xff]
  %v39 = vld [vmem:[%s0 + $0x98] sm:$0xff]
  %v40 = vld [vmem:[%s0 + $0xa0] sm:$0xff]
  %v41 = vld [vmem:[%s0 + $0xa8] sm:$0xff]
  %v42 = vld [vmem:[%s0 + $0xb0] sm:$0xff]
  %v43 = vld [vmem:[%s0 + $0xb8] sm:$0xff]
  %v44 = vld [vmem:[%s0 + $0xc0] sm:$0xff]
  %v45 = vld [vmem:[%s0 + $0xc8] sm:$0xff]
  %v46 = vld [vmem:[%s0 + $0xd0] sm:$0xff]
  %v47 = vld [vmem:[%s0 + $0xd8] sm:$0xff]
  %v48 = vld [vmem:[%s0 + $0xe0] sm:$0xff]
  %v49 = vld [vmem:[%s0 + $0xe8] sm:$0xff]
  %v50 = vld [vmem:[%s0 + $0xf0] sm:$0xff]
  %v51 = vld [vmem:[%s0 + $0xf8] sm:$0xff]
  %v52 = vld [vmem:[%s1] sm:$0xff]
  %v53 = vld [vmem:[%s1 + $0x8] sm:$0xff]
  %v54 = vld [vmem:[%s1 + $0x10] sm:$0xff]
  %v55 = vld [vmem:[%s1 + $0x18] sm:$0xff]
  %v56 = vld [vmem:[%s1 + $0x20] sm:$0xff]
  %v57 = vld [vmem:[%s1 + $0x28] sm:$0xff]
  %v58 = vld [vmem:[%s1 + $0x30] sm:$0xff]
  %v59 = vld [vmem:[%s1 + $0x38] sm:$0xff]
  %vm60 = vcmask 523264
  %v62 = vsel %vm60, %v20, 0
  %v65 = vsel %vm60, %v21, 0
  %v68 = vsel %vm60, %v22, 0
  %v71 = vsel %vm60, %v23, 0
  %v74 = vsel %vm60, %v24, 0
  %v77 = vsel %vm60, %v25, 0
  %v80 = vsel %vm60, %v26, 0
  %v83 = vsel %vm60, %v27, 0
  %v86 = vsel %vm60, %v28, 0
  %v89 = vsel %vm60, %v29, 0
  %v92 = vsel %vm60, %v30, 0
  %v95 = vsel %vm60, %v31, 0
  %v98 = vsel %vm60, %v32, 0
  %v101 = vsel %vm60, %v33, 0
  %v104 = vsel %vm60, %v34, 0
  %v107 = vsel %vm60, %v35, 0
  %v110 = vsel %vm60, %v36, 0
  %v113 = vsel %vm60, %v37, 0
  %v116 = vsel %vm60, %v38, 0
  %v119 = vsel %vm60, %v39, 0
  %v122 = vsel %vm60, %v40, 0
  %v125 = vsel %vm60, %v41, 0
  %v128 = vsel %vm60, %v42, 0
  %v131 = vsel %vm60, %v43, 0
  %v134 = vsel %vm60, %v44, 0
  %v137 = vsel %vm60, %v45, 0
  %v140 = vsel %vm60, %v46, 0
  %v143 = vsel %vm60, %v47, 0
  %v146 = vsel %vm60, %v48, 0
  %v149 = vsel %vm60, %v49, 0
  %v152 = vsel %vm60, %v50, 0
  %v155 = vsel %vm60, %v51, 0
  %157 = vmatprep.subr.mxu0 0.0
  %158 = vmatpush1.msra.mxu0 0.0
  %159 = vmatprep.subr.mxu0 0.0
  %160 = vmatpush1.msra.mxu0 0.0
  %161 = vmatprep.subr.mxu0 0.0
  %162 = vmatpush1.msra.mxu0 0.0
  %163 = vmatprep.subr.mxu0 0.0
  %164 = vmatpush1.msra.mxu0 0.0
  %165 = vmatprep.subr.mxu0 0.0
  %166 = vmatpush1.msra.mxu0 0.0
  %167 = vmatprep.subr.mxu0 0.0
  %168 = vmatpush1.msra.mxu0 0.0
  %169 = vmatprep.subr.mxu0 0.0
  %170 = vmatpush1.msra.mxu0 0.0
  %171 = vmatprep.subr.mxu0 0.0
  %172 = vmatpush1.msra.mxu0 0.0
  %173 = vmatprep.subr.mxu0 0.0
  %174 = vmatpush1.msra.mxu0 %v59
  %175 = vmatprep.subr.mxu0 0.0
  %176 = vmatpush1.msra.mxu0 %v58
  %177 = vmatprep.subr.mxu0 0.0
  %178 = vmatpush1.msra.mxu0 %v57
  %179 = vmatprep.subr.mxu0 0.0
  %180 = vmatpush1.msra.mxu0 %v56
  %181 = vmatprep.subr.mxu0 0.0
  %182 = vmatpush1.msra.mxu0 %v55
  %183 = vmatprep.subr.mxu0 0.0
  %184 = vmatpush1.msra.mxu0 %v54
  %185 = vmatprep.subr.mxu0 0.0
  %186 = vmatpush1.msra.mxu0 %v53
  %187 = vmatprep.subr.mxu0 0.0
  %188 = vmatpush1.msra.mxu0 %v52
  %189 = vmatprep.subr.mxu0 0.0
  %190 = vmatpush2.msra.mxu0 0.0
  %191 = vmatprep.subr.mxu0 0.0
  %192 = vmatpush2.msra.mxu0 0.0
  %193 = vmatprep.subr.mxu0 0.0
  %194 = vmatpush2.msra.mxu0 0.0
  %195 = vmatprep.subr.mxu0 0.0
  %196 = vmatpush2.msra.mxu0 0.0
  %197 = vmatprep.subr.mxu0 0.0
  %198 = vmatpush2.msra.mxu0 0.0
  %199 = vmatprep.subr.mxu0 0.0
  %200 = vmatpush2.msra.mxu0 0.0
  %201 = vmatprep.subr.mxu0 0.0
  %202 = vmatpush2.msra.mxu0 0.0
  %203 = vmatprep.subr.mxu0 0.0
  %204 = vmatpush2.msra.mxu0 0.0
  %205 = vmatprep.subr.mxu0 0.0
  %206 = vmatpush2.msra.mxu0 0.0
  %207 = vmatprep.subr.mxu0 0.0
  %208 = vmatpush2.msra.mxu0 0.0
  %209 = vmatprep.subr.mxu0 0.0
  %210 = vmatpush2.msra.mxu0 0.0
  %211 = vmatprep.subr.mxu0 0.0
  %212 = vmatpush2.msra.mxu0 0.0
  %213 = vmatprep.subr.mxu0 0.0
  %214 = vmatpush2.msra.mxu0 0.0
  %215 = vmatprep.subr.mxu0 0.0
  %216 = vmatpush2.msra.mxu0 0.0
  %217 = vmatprep.subr.mxu0 0.0
  %218 = vmatpush2.msra.mxu0 0.0
  %219 = vmatprep.subr.mxu0 0.0
  %220 = vmatpush2.msra.mxu0 0.0
  %221 = vmatprep.mubr.f32.mxu0 0.0
  %222 = vmatmul.mubr.f32.gmra.mxu0 %v62
  %v223 = vpop.f32.mrf.mxu0
  %v224 = vadd.f32 0.0, %v223
  %v225 = vpop.f32.mrf.mxu0
  %226 = vmatprep.mubr.f32.mxu0 0.0
  %227 = vmatmul.mubr.f32.gmra.mxu0 %v65
  %v228 = vpop.f32.mrf.mxu0
  %v229 = vadd.f32 0.0, %v228
  %v230 = vpop.f32.mrf.mxu0
  %231 = vmatprep.mubr.f32.mxu0 0.0
  %232 = vmatmul.mubr.f32.gmra.mxu0 %v68
  %v233 = vpop.f32.mrf.mxu0
  %v234 = vadd.f32 0.0, %v233
  %v235 = vpop.f32.mrf.mxu0
  %236 = vmatprep.mubr.f32.mxu0 0.0
  %237 = vmatmul.mubr.f32.gmra.mxu0 %v71
  %v238 = vpop.f32.mrf.mxu0
  %v239 = vadd.f32 0.0, %v238
  %v240 = vpop.f32.mrf.mxu0
  %241 = vmatprep.mubr.f32.mxu0 0.0
  %242 = vmatmul.mubr.f32.gmra.mxu0 %v74
  %v243 = vpop.f32.mrf.mxu0
  %v244 = vadd.f32 0.0, %v243
  %v245 = vpop.f32.mrf.mxu0
  %246 = vmatprep.mubr.f32.mxu0 0.0
  %247 = vmatmul.mubr.f32.gmra.mxu0 %v77
  %v248 = vpop.f32.mrf.mxu0
  %v249 = vadd.f32 0.0, %v248
  %v250 = vpop.f32.mrf.mxu0
  %251 = vmatprep.mubr.f32.mxu0 0.0
  %252 = vmatmul.mubr.f32.gmra.mxu0 %v80
  %v253 = vpop.f32.mrf.mxu0
  %v254 = vadd.f32 0.0, %v253
  %v255 = vpop.f32.mrf.mxu0
  %256 = vmatprep.mubr.f32.mxu0 0.0
  %257 = vmatmul.mubr.f32.gmra.mxu0 %v83
  %v258 = vpop.f32.mrf.mxu0
  %v259 = vadd.f32 0.0, %v258
  %v260 = vpop.f32.mrf.mxu0
  %261 = vmatprep.mubr.f32.mxu0 0.0
  %262 = vmatmul.mubr.f32.gmra.mxu0 %v86
  %v263 = vpop.f32.mrf.mxu0
  %v264 = vadd.f32 0.0, %v263
  %v265 = vpop.f32.mrf.mxu0
  %266 = vmatprep.mubr.f32.mxu0 0.0
  %267 = vmatmul.mubr.f32.gmra.mxu0 %v89
  %v268 = vpop.f32.mrf.mxu0
  %v269 = vadd.f32 0.0, %v268
  %v270 = vpop.f32.mrf.mxu0
  %271 = vmatprep.mubr.f32.mxu0 0.0
  %272 = vmatmul.mubr.f32.gmra.mxu0 %v92
  %v273 = vpop.f32.mrf.mxu0
  %v274 = vadd.f32 0.0, %v273
  %v275 = vpop.f32.mrf.mxu0
  %276 = vmatprep.mubr.f32.mxu0 0.0
  %277 = vmatmul.mubr.f32.gmra.mxu0 %v95
  %v278 = vpop.f32.mrf.mxu0
  %v279 = vadd.f32 0.0, %v278
  %v280 = vpop.f32.mrf.mxu0
  %281 = vmatprep.mubr.f32.mxu0 0.0
  %282 = vmatmul.mubr.f32.gmra.mxu0 %v98
  %v283 = vpop.f32.mrf.mxu0
  %v284 = vadd.f32 0.0, %v283
  %v285 = vpop.f32.mrf.mxu0
  %286 = vmatprep.mubr.f32.mxu0 0.0
  %287 = vmatmul.mubr.f32.gmra.mxu0 %v101
  %v288 = vpop.f32.mrf.mxu0
  %v289 = vadd.f32 0.0, %v288
  %v290 = vpop.f32.mrf.mxu0
  %291 = vmatprep.mubr.f32.mxu0 0.0
  %292 = vmatmul.mubr.f32.gmra.mxu0 %v104
  %v293 = vpop.f32.mrf.mxu0
  %v294 = vadd.f32 0.0, %v293
  %v295 = vpop.f32.mrf.mxu0
  %296 = vmatprep.mubr.f32.mxu0 0.0
  %297 = vmatmul.mubr.f32.gmra.mxu0 %v107
  %v298 = vpop.f32.mrf.mxu0
  %v299 = vadd.f32 0.0, %v298
  %v300 = vpop.f32.mrf.mxu0
  %301 = vmatprep.mubr.f32.mxu0 0.0
  %302 = vmatmul.mubr.f32.gmra.mxu0 %v110
  %v303 = vpop.f32.mrf.mxu0
  %v304 = vadd.f32 0.0, %v303
  %v305 = vpop.f32.mrf.mxu0
  %306 = vmatprep.mubr.f32.mxu0 0.0
  %307 = vmatmul.mubr.f32.gmra.mxu0 %v113
  %v308 = vpop.f32.mrf.mxu0
  %v309 = vadd.f32 0.0, %v308
  %v310 = vpop.f32.mrf.mxu0
  %311 = vmatprep.mubr.f32.mxu0 0.0
  %312 = vmatmul.mubr.f32.gmra.mxu0 %v116
  %v313 = vpop.f32.mrf.mxu0
  %v314 = vadd.f32 0.0, %v313
  %v315 = vpop.f32.mrf.mxu0
  %316 = vmatprep.mubr.f32.mxu0 0.0
  %317 = vmatmul.mubr.f32.gmra.mxu0 %v119
  %v318 = vpop.f32.mrf.mxu0
  %v319 = vadd.f32 0.0, %v318
  %v320 = vpop.f32.mrf.mxu0
  %321 = vmatprep.mubr.f32.mxu0 0.0
  %322 = vmatmul.mubr.f32.gmra.mxu0 %v122
  %v323 = vpop.f32.mrf.mxu0
  %v324 = vadd.f32 0.0, %v323
  %v325 = vpop.f32.mrf.mxu0
  %326 = vmatprep.mubr.f32.mxu0 0.0
  %327 = vmatmul.mubr.f32.gmra.mxu0 %v125
  %v328 = vpop.f32.mrf.mxu0
  %v329 = vadd.f32 0.0, %v328
  %v330 = vpop.f32.mrf.mxu0
  %331 = vmatprep.mubr.f32.mxu0 0.0
  %332 = vmatmul.mubr.f32.gmra.mxu0 %v128
  %v333 = vpop.f32.mrf.mxu0
  %v334 = vadd.f32 0.0, %v333
  %v335 = vpop.f32.mrf.mxu0
  %336 = vmatprep.mubr.f32.mxu0 0.0
  %337 = vmatmul.mubr.f32.gmra.mxu0 %v131
  %v338 = vpop.f32.mrf.mxu0
  %v339 = vadd.f32 0.0, %v338
  %v340 = vpop.f32.mrf.mxu0
  %341 = vmatprep.mubr.f32.mxu0 0.0
  %342 = vmatmul.mubr.f32.gmra.mxu0 %v134
  %v343 = vpop.f32.mrf.mxu0
  %v344 = vadd.f32 0.0, %v343
  %v345 = vpop.f32.mrf.mxu0
  %346 = vmatprep.mubr.f32.mxu0 0.0
  %347 = vmatmul.mubr.f32.gmra.mxu0 %v137
  %v348 = vpop.f32.mrf.mxu0
  %v349 = vadd.f32 0.0, %v348
  %v350 = vpop.f32.mrf.mxu0
  %351 = vmatprep.mubr.f32.mxu0 0.0
  %352 = vmatmul.mubr.f32.gmra.mxu0 %v140
  %v353 = vpop.f32.mrf.mxu0
  %v354 = vadd.f32 0.0, %v353
  %v355 = vpop.f32.mrf.mxu0
  %356 = vmatprep.mubr.f32.mxu0 0.0
  %357 = vmatmul.mubr.f32.gmra.mxu0 %v143
  %v358 = vpop.f32.mrf.mxu0
  %v359 = vadd.f32 0.0, %v358
  %v360 = vpop.f32.mrf.mxu0
  %361 = vmatprep.mubr.f32.mxu0 0.0
  %362 = vmatmul.mubr.f32.gmra.mxu0 %v146
  %v363 = vpop.f32.mrf.mxu0
  %v364 = vadd.f32 0.0, %v363
  %v365 = vpop.f32.mrf.mxu0
  %366 = vmatprep.mubr.f32.mxu0 0.0
  %367 = vmatmul.mubr.f32.gmra.mxu0 %v149
  %v368 = vpop.f32.mrf.mxu0
  %v369 = vadd.f32 0.0, %v368
  %v370 = vpop.f32.mrf.mxu0
  %371 = vmatprep.mubr.f32.mxu0 0.0
  %372 = vmatmul.mubr.f32.gmra.mxu0 %v152
  %v373 = vpop.f32.mrf.mxu0
  %v374 = vadd.f32 0.0, %v373
  %v375 = vpop.f32.mrf.mxu0
  %376 = vmatprep.mubr.f32.mxu0 0.0
  %377 = vmatmul.mubr.f32.gmra.mxu0 %v155
  %v378 = vpop.f32.mrf.mxu0
  %v379 = vadd.f32 0.0, %v378
  %v380 = vpop.f32.mrf.mxu0
  %381 = vdwg.mxu0
  %v382 = vld [vmem:[%s2] sm:$0x1]
  %v384 = vlaneseq
  %v385 = vshrl.u32 %v384, 7
  %v386 = vsub.s32 0, %v385
  %v387 = vrot.slane %v382, %v386
  %v389 = vmul.f32 %v224, %v387
  %v390 = vmul.f32 %v229, %v387
  %v391 = vmul.f32 %v234, %v387
  %v392 = vmul.f32 %v239, %v387
  %v393 = vmul.f32 %v244, %v387
  %v394 = vmul.f32 %v249, %v387
  %v395 = vmul.f32 %v254, %v387
  %v396 = vmul.f32 %v259, %v387
  %v397 = vmul.f32 %v264, %v387
  %v398 = vmul.f32 %v269, %v387
  %v399 = vmul.f32 %v274, %v387
  %v400 = vmul.f32 %v279, %v387
  %v401 = vmul.f32 %v284, %v387
  %v402 = vmul.f32 %v289, %v387
  %v403 = vmul.f32 %v294, %v387
  %v404 = vmul.f32 %v299, %v387
  %v405 = vmul.f32 %v304, %v387
  %v406 = vmul.f32 %v309, %v387
  %v407 = vmul.f32 %v314, %v387
  %v408 = vmul.f32 %v319, %v387
  %v409 = vmul.f32 %v324, %v387
  %v410 = vmul.f32 %v329, %v387
  %v411 = vmul.f32 %v334, %v387
  %v412 = vmul.f32 %v339, %v387
  %v413 = vmul.f32 %v344, %v387
  %v414 = vmul.f32 %v349, %v387
  %v415 = vmul.f32 %v354, %v387
  %v416 = vmul.f32 %v359, %v387
  %v417 = vmul.f32 %v364, %v387
  %v418 = vmul.f32 %v369, %v387
  %v419 = vmul.f32 %v374, %v387
  %v420 = vmul.f32 %v379, %v387
  %vm421 = vcmask 261120
  %v422 = vsel %vm421, %v389, 0.0
  %423 = vadd.xlane.f32.xlu0 %v422
  %v424 = vpop.xlane.xlu0 %423
  %v425 = vsel %vm421, %v390, 0.0
  %426 = vadd.xlane.f32.xlu0 %v425
  %v427 = vpop.xlane.xlu0 %426
  %v428 = vsel %vm421, %v391, 0.0
  %429 = vadd.xlane.f32.xlu0 %v428
  %v430 = vpop.xlane.xlu0 %429
  %v431 = vsel %vm421, %v392, 0.0
  %432 = vadd.xlane.f32.xlu0 %v431
  %v433 = vpop.xlane.xlu0 %432
  %v434 = vsel %vm421, %v393, 0.0
  %435 = vadd.xlane.f32.xlu0 %v434
  %v436 = vpop.xlane.xlu0 %435
  %v437 = vsel %vm421, %v394, 0.0
  %438 = vadd.xlane.f32.xlu0 %v437
  %v439 = vpop.xlane.xlu0 %438
  %v440 = vsel %vm421, %v395, 0.0
  %441 = vadd.xlane.f32.xlu0 %v440
  %v442 = vpop.xlane.xlu0 %441
  %v443 = vsel %vm421, %v396, 0.0
  %444 = vadd.xlane.f32.xlu0 %v443
  %v445 = vpop.xlane.xlu0 %444
  %v446 = vsel %vm421, %v397, 0.0
  %447 = vadd.xlane.f32.xlu0 %v446
  %v448 = vpop.xlane.xlu0 %447
  %v449 = vsel %vm421, %v398, 0.0
  %450 = vadd.xlane.f32.xlu0 %v449
  %v451 = vpop.xlane.xlu0 %450
  %v452 = vsel %vm421, %v399, 0.0
  %453 = vadd.xlane.f32.xlu0 %v452
  %v454 = vpop.xlane.xlu0 %453
  %v455 = vsel %vm421, %v400, 0.0
  %456 = vadd.xlane.f32.xlu0 %v455
  %v457 = vpop.xlane.xlu0 %456
  %v458 = vsel %vm421, %v401, 0.0
  %459 = vadd.xlane.f32.xlu0 %v458
  %v460 = vpop.xlane.xlu0 %459
  %v461 = vsel %vm421, %v402, 0.0
  %462 = vadd.xlane.f32.xlu0 %v461
  %v463 = vpop.xlane.xlu0 %462
  %v464 = vsel %vm421, %v403, 0.0
  %465 = vadd.xlane.f32.xlu0 %v464
  %v466 = vpop.xlane.xlu0 %465
  %v467 = vsel %vm421, %v404, 0.0
  %468 = vadd.xlane.f32.xlu0 %v467
  %v469 = vpop.xlane.xlu0 %468
  %v470 = vsel %vm421, %v405, 0.0
  %471 = vadd.xlane.f32.xlu0 %v470
  %v472 = vpop.xlane.xlu0 %471
  %v473 = vsel %vm421, %v406, 0.0
  %474 = vadd.xlane.f32.xlu0 %v473
  %v475 = vpop.xlane.xlu0 %474
  %v476 = vsel %vm421, %v407, 0.0
  %477 = vadd.xlane.f32.xlu0 %v476
  %v478 = vpop.xlane.xlu0 %477
  %v479 = vsel %vm421, %v408, 0.0
  %480 = vadd.xlane.f32.xlu0 %v479
  %v481 = vpop.xlane.xlu0 %480
  %v482 = vsel %vm421, %v409, 0.0
  %483 = vadd.xlane.f32.xlu0 %v482
  %v484 = vpop.xlane.xlu0 %483
  %v485 = vsel %vm421, %v410, 0.0
  %486 = vadd.xlane.f32.xlu0 %v485
  %v487 = vpop.xlane.xlu0 %486
  %v488 = vsel %vm421, %v411, 0.0
  %489 = vadd.xlane.f32.xlu0 %v488
  %v490 = vpop.xlane.xlu0 %489
  %v491 = vsel %vm421, %v412, 0.0
  %492 = vadd.xlane.f32.xlu0 %v491
  %v493 = vpop.xlane.xlu0 %492
  %v494 = vsel %vm421, %v413, 0.0
  %495 = vadd.xlane.f32.xlu0 %v494
  %v496 = vpop.xlane.xlu0 %495
  %v497 = vsel %vm421, %v414, 0.0
  %498 = vadd.xlane.f32.xlu0 %v497
  %v499 = vpop.xlane.xlu0 %498
  %v500 = vsel %vm421, %v415, 0.0
  %501 = vadd.xlane.f32.xlu0 %v500
  %v502 = vpop.xlane.xlu0 %501
  %v503 = vsel %vm421, %v416, 0.0
  %504 = vadd.xlane.f32.xlu0 %v503
  %v505 = vpop.xlane.xlu0 %504
  %v506 = vsel %vm421, %v417, 0.0
  %507 = vadd.xlane.f32.xlu0 %v506
  %v508 = vpop.xlane.xlu0 %507
  %v509 = vsel %vm421, %v418, 0.0
  %510 = vadd.xlane.f32.xlu0 %v509
  %v511 = vpop.xlane.xlu0 %510
  %v512 = vsel %vm421, %v419, 0.0
  %513 = vadd.xlane.f32.xlu0 %v512
  %v514 = vpop.xlane.xlu0 %513
  %v515 = vsel %vm421, %v420, 0.0
  %516 = vadd.xlane.f32.xlu0 %v515
  %v517 = vpop.xlane.xlu0 %516
  %vm518 = vcmask 7168
  %519 = vst.msk [vmem:[%s5] sm:$0xff] %vm518, %v424
  %520 = vst.msk [vmem:[%s5 + $0x8] sm:$0xff] %vm518, %v427
  %521 = vst.msk [vmem:[%s5 + $0x10] sm:$0xff] %vm518, %v430
  %522 = vst.msk [vmem:[%s5 + $0x18] sm:$0xff] %vm518, %v433
  %523 = vst.msk [vmem:[%s5 + $0x20] sm:$0xff] %vm518, %v436
  %524 = vst.msk [vmem:[%s5 + $0x28] sm:$0xff] %vm518, %v439
  %525 = vst.msk [vmem:[%s5 + $0x30] sm:$0xff] %vm518, %v442
  %526 = vst.msk [vmem:[%s5 + $0x38] sm:$0xff] %vm518, %v445
  %527 = vst.msk [vmem:[%s5 + $0x40] sm:$0xff] %vm518, %v448
  %528 = vst.msk [vmem:[%s5 + $0x48] sm:$0xff] %vm518, %v451
  %529 = vst.msk [vmem:[%s5 + $0x50] sm:$0xff] %vm518, %v454
  %530 = vst.msk [vmem:[%s5 + $0x58] sm:$0xff] %vm518, %v457
  %531 = vst.msk [vmem:[%s5 + $0x60] sm:$0xff] %vm518, %v460
  %532 = vst.msk [vmem:[%s5 + $0x68] sm:$0xff] %vm518, %v463
  %533 = vst.msk [vmem:[%s5 + $0x70] sm:$0xff] %vm518, %v466
  %534 = vst.msk [vmem:[%s5 + $0x78] sm:$0xff] %vm518, %v469
  %535 = vst.msk [vmem:[%s5 + $0x80] sm:$0xff] %vm518, %v472
  %536 = vst.msk [vmem:[%s5 + $0x88] sm:$0xff] %vm518, %v475
  %537 = vst.msk [vmem:[%s5 + $0x90] sm:$0xff] %vm518, %v478
  %538 = vst.msk [vmem:[%s5 + $0x98] sm:$0xff] %vm518, %v481
  %539 = vst.msk [vmem:[%s5 + $0xa0] sm:$0xff] %vm518, %v484
  %540 = vst.msk [vmem:[%s5 + $0xa8] sm:$0xff] %vm518, %v487
  %541 = vst.msk [vmem:[%s5 + $0xb0] sm:$0xff] %vm518, %v490
  %542 = vst.msk [vmem:[%s5 + $0xb8] sm:$0xff] %vm518, %v493
  %543 = vst.msk [vmem:[%s5 + $0xc0] sm:$0xff] %vm518, %v496
  %544 = vst.msk [vmem:[%s5 + $0xc8] sm:$0xff] %vm518, %v499
  %545 = vst.msk [vmem:[%s5 + $0xd0] sm:$0xff] %vm518, %v502
  %546 = vst.msk [vmem:[%s5 + $0xd8] sm:$0xff] %vm518, %v505
  %547 = vst.msk [vmem:[%s5 + $0xe0] sm:$0xff] %vm518, %v508
  %548 = vst.msk [vmem:[%s5 + $0xe8] sm:$0xff] %vm518, %v511
  %549 = vst.msk [vmem:[%s5 + $0xf0] sm:$0xff] %vm518, %v514
  %550 = vst.msk [vmem:[%s5 + $0xf8] sm:$0xff] %vm518, %v517
  %v551 = vld [vmem:[%s3] sm:$0x1]
  %v553 = vlaneseq
  %v554 = vshrl.u32 %v553, 7
  %v555 = vsub.s32 0, %v554
  %v556 = vrot.slane %v551, %v555
  %v558 = vmul.f32 %v224, %v556
  %v559 = vmul.f32 %v229, %v556
  %v560 = vmul.f32 %v234, %v556
  %v561 = vmul.f32 %v239, %v556
  %v562 = vmul.f32 %v244, %v556
  %v563 = vmul.f32 %v249, %v556
  %v564 = vmul.f32 %v254, %v556
  %v565 = vmul.f32 %v259, %v556
  %v566 = vmul.f32 %v264, %v556
  %v567 = vmul.f32 %v269, %v556
  %v568 = vmul.f32 %v274, %v556
  %v569 = vmul.f32 %v279, %v556
  %v570 = vmul.f32 %v284, %v556
  %v571 = vmul.f32 %v289, %v556
  %v572 = vmul.f32 %v294, %v556
  %v573 = vmul.f32 %v299, %v556
  %v574 = vmul.f32 %v304, %v556
  %v575 = vmul.f32 %v309, %v556
  %v576 = vmul.f32 %v314, %v556
  %v577 = vmul.f32 %v319, %v556
  %v578 = vmul.f32 %v324, %v556
  %v579 = vmul.f32 %v329, %v556
  %v580 = vmul.f32 %v334, %v556
  %v581 = vmul.f32 %v339, %v556
  %v582 = vmul.f32 %v344, %v556
  %v583 = vmul.f32 %v349, %v556
  %v584 = vmul.f32 %v354, %v556
  %v585 = vmul.f32 %v359, %v556
  %v586 = vmul.f32 %v364, %v556
  %v587 = vmul.f32 %v369, %v556
  %v588 = vmul.f32 %v374, %v556
  %v589 = vmul.f32 %v379, %v556
  %v590 = vsel %vm421, %v558, 0.0
  %591 = vadd.xlane.f32.xlu0 %v590
  %v592 = vpop.xlane.xlu0 %591
  %v593 = vsel %vm421, %v559, 0.0
  %594 = vadd.xlane.f32.xlu0 %v593
  %v595 = vpop.xlane.xlu0 %594
  %v596 = vsel %vm421, %v560, 0.0
  %597 = vadd.xlane.f32.xlu0 %v596
  %v598 = vpop.xlane.xlu0 %597
  %v599 = vsel %vm421, %v561, 0.0
  %600 = vadd.xlane.f32.xlu0 %v599
  %v601 = vpop.xlane.xlu0 %600
  %v602 = vsel %vm421, %v562, 0.0
  %603 = vadd.xlane.f32.xlu0 %v602
  %v604 = vpop.xlane.xlu0 %603
  %v605 = vsel %vm421, %v563, 0.0
  %606 = vadd.xlane.f32.xlu0 %v605
  %v607 = vpop.xlane.xlu0 %606
  %v608 = vsel %vm421, %v564, 0.0
  %609 = vadd.xlane.f32.xlu0 %v608
  %v610 = vpop.xlane.xlu0 %609
  %v611 = vsel %vm421, %v565, 0.0
  %612 = vadd.xlane.f32.xlu0 %v611
  %v613 = vpop.xlane.xlu0 %612
  %v614 = vsel %vm421, %v566, 0.0
  %615 = vadd.xlane.f32.xlu0 %v614
  %v616 = vpop.xlane.xlu0 %615
  %v617 = vsel %vm421, %v567, 0.0
  %618 = vadd.xlane.f32.xlu0 %v617
  %v619 = vpop.xlane.xlu0 %618
  %v620 = vsel %vm421, %v568, 0.0
  %621 = vadd.xlane.f32.xlu0 %v620
  %v622 = vpop.xlane.xlu0 %621
  %v623 = vsel %vm421, %v569, 0.0
  %624 = vadd.xlane.f32.xlu0 %v623
  %v625 = vpop.xlane.xlu0 %624
  %v626 = vsel %vm421, %v570, 0.0
  %627 = vadd.xlane.f32.xlu0 %v626
  %v628 = vpop.xlane.xlu0 %627
  %v629 = vsel %vm421, %v571, 0.0
  %630 = vadd.xlane.f32.xlu0 %v629
  %v631 = vpop.xlane.xlu0 %630
  %v632 = vsel %vm421, %v572, 0.0
  %633 = vadd.xlane.f32.xlu0 %v632
  %v634 = vpop.xlane.xlu0 %633
  %v635 = vsel %vm421, %v573, 0.0
  %636 = vadd.xlane.f32.xlu0 %v635
  %v637 = vpop.xlane.xlu0 %636
  %v638 = vsel %vm421, %v574, 0.0
  %639 = vadd.xlane.f32.xlu0 %v638
  %v640 = vpop.xlane.xlu0 %639
  %v641 = vsel %vm421, %v575, 0.0
  %642 = vadd.xlane.f32.xlu0 %v641
  %v643 = vpop.xlane.xlu0 %642
  %v644 = vsel %vm421, %v576, 0.0
  %645 = vadd.xlane.f32.xlu0 %v644
  %v646 = vpop.xlane.xlu0 %645
  %v647 = vsel %vm421, %v577, 0.0
  %648 = vadd.xlane.f32.xlu0 %v647
  %v649 = vpop.xlane.xlu0 %648
  %v650 = vsel %vm421, %v578, 0.0
  %651 = vadd.xlane.f32.xlu0 %v650
  %v652 = vpop.xlane.xlu0 %651
  %v653 = vsel %vm421, %v579, 0.0
  %654 = vadd.xlane.f32.xlu0 %v653
  %v655 = vpop.xlane.xlu0 %654
  %v656 = vsel %vm421, %v580, 0.0
  %657 = vadd.xlane.f32.xlu0 %v656
  %v658 = vpop.xlane.xlu0 %657
  %v659 = vsel %vm421, %v581, 0.0
  %660 = vadd.xlane.f32.xlu0 %v659
  %v661 = vpop.xlane.xlu0 %660
  %v662 = vsel %vm421, %v582, 0.0
  %663 = vadd.xlane.f32.xlu0 %v662
  %v664 = vpop.xlane.xlu0 %663
  %v665 = vsel %vm421, %v583, 0.0
  %666 = vadd.xlane.f32.xlu0 %v665
  %v667 = vpop.xlane.xlu0 %666
  %v668 = vsel %vm421, %v584, 0.0
  %669 = vadd.xlane.f32.xlu0 %v668
  %v670 = vpop.xlane.xlu0 %669
  %v671 = vsel %vm421, %v585, 0.0
  %672 = vadd.xlane.f32.xlu0 %v671
  %v673 = vpop.xlane.xlu0 %672
  %v674 = vsel %vm421, %v586, 0.0
  %675 = vadd.xlane.f32.xlu0 %v674
  %v676 = vpop.xlane.xlu0 %675
  %v677 = vsel %vm421, %v587, 0.0
  %678 = vadd.xlane.f32.xlu0 %v677
  %v679 = vpop.xlane.xlu0 %678
  %v680 = vsel %vm421, %v588, 0.0
  %681 = vadd.xlane.f32.xlu0 %v680
  %v682 = vpop.xlane.xlu0 %681
  %v683 = vsel %vm421, %v589, 0.0
  %684 = vadd.xlane.f32.xlu0 %v683
  %v685 = vpop.xlane.xlu0 %684
  %686 = vst.msk [vmem:[%s6] sm:$0xff] %vm518, %v592
  %687 = vst.msk [vmem:[%s6 + $0x8] sm:$0xff] %vm518, %v595
  %688 = vst.msk [vmem:[%s6 + $0x10] sm:$0xff] %vm518, %v598
  %689 = vst.msk [vmem:[%s6 + $0x18] sm:$0xff] %vm518, %v601
  %690 = vst.msk [vmem:[%s6 + $0x20] sm:$0xff] %vm518, %v604
  %691 = vst.msk [vmem:[%s6 + $0x28] sm:$0xff] %vm518, %v607
  %692 = vst.msk [vmem:[%s6 + $0x30] sm:$0xff] %vm518, %v610
  %693 = vst.msk [vmem:[%s6 + $0x38] sm:$0xff] %vm518, %v613
  %694 = vst.msk [vmem:[%s6 + $0x40] sm:$0xff] %vm518, %v616
  %695 = vst.msk [vmem:[%s6 + $0x48] sm:$0xff] %vm518, %v619
  %696 = vst.msk [vmem:[%s6 + $0x50] sm:$0xff] %vm518, %v622
  %697 = vst.msk [vmem:[%s6 + $0x58] sm:$0xff] %vm518, %v625
  %698 = vst.msk [vmem:[%s6 + $0x60] sm:$0xff] %vm518, %v628
  %699 = vst.msk [vmem:[%s6 + $0x68] sm:$0xff] %vm518, %v631
  %700 = vst.msk [vmem:[%s6 + $0x70] sm:$0xff] %vm518, %v634
  %701 = vst.msk [vmem:[%s6 + $0x78] sm:$0xff] %vm518, %v637
  %702 = vst.msk [vmem:[%s6 + $0x80] sm:$0xff] %vm518, %v640
  %703 = vst.msk [vmem:[%s6 + $0x88] sm:$0xff] %vm518, %v643
  %704 = vst.msk [vmem:[%s6 + $0x90] sm:$0xff] %vm518, %v646
  %705 = vst.msk [vmem:[%s6 + $0x98] sm:$0xff] %vm518, %v649
  %706 = vst.msk [vmem:[%s6 + $0xa0] sm:$0xff] %vm518, %v652
  %707 = vst.msk [vmem:[%s6 + $0xa8] sm:$0xff] %vm518, %v655
  %708 = vst.msk [vmem:[%s6 + $0xb0] sm:$0xff] %vm518, %v658
  %709 = vst.msk [vmem:[%s6 + $0xb8] sm:$0xff] %vm518, %v661
  %710 = vst.msk [vmem:[%s6 + $0xc0] sm:$0xff] %vm518, %v664
  %711 = vst.msk [vmem:[%s6 + $0xc8] sm:$0xff] %vm518, %v667
  %712 = vst.msk [vmem:[%s6 + $0xd0] sm:$0xff] %vm518, %v670
  %713 = vst.msk [vmem:[%s6 + $0xd8] sm:$0xff] %vm518, %v673
  %714 = vst.msk [vmem:[%s6 + $0xe0] sm:$0xff] %vm518, %v676
  %715 = vst.msk [vmem:[%s6 + $0xe8] sm:$0xff] %vm518, %v679
  %716 = vst.msk [vmem:[%s6 + $0xf0] sm:$0xff] %vm518, %v682
  %717 = vst.msk [vmem:[%s6 + $0xf8] sm:$0xff] %vm518, %v685
  %v718 = vpack.c.bf16 %v229, %v224
  %v719 = vpack.c.bf16 %v239, %v234
  %v720 = vpack.c.bf16 %v249, %v244
  %v721 = vpack.c.bf16 %v259, %v254
  %v722 = vpack.c.bf16 %v269, %v264
  %v723 = vpack.c.bf16 %v279, %v274
  %v724 = vpack.c.bf16 %v289, %v284
  %v725 = vpack.c.bf16 %v299, %v294
  %v726 = vpack.c.bf16 %v309, %v304
  %v727 = vpack.c.bf16 %v319, %v314
  %v728 = vpack.c.bf16 %v329, %v324
  %v729 = vpack.c.bf16 %v339, %v334
  %v730 = vpack.c.bf16 %v349, %v344
  %v731 = vpack.c.bf16 %v359, %v354
  %v732 = vpack.c.bf16 %v369, %v364
  %v733 = vpack.c.bf16 %v379, %v374
  %v750 = vunpack.c.l.b16 %v718
  %v751 = vunpack.c.h.b16 %v718
  %v752 = vunpack.c.l.b16 %v719
  %v753 = vunpack.c.h.b16 %v719
  %v754 = vunpack.c.l.b16 %v720
  %v755 = vunpack.c.h.b16 %v720
  %v756 = vunpack.c.l.b16 %v721
  %v757 = vunpack.c.h.b16 %v721
  %v758 = vunpack.c.l.b16 %v722
  %v759 = vunpack.c.h.b16 %v722
  %v760 = vunpack.c.l.b16 %v723
  %v761 = vunpack.c.h.b16 %v723
  %v762 = vunpack.c.l.b16 %v724
  %v763 = vunpack.c.h.b16 %v724
  %v764 = vunpack.c.l.b16 %v725
  %v765 = vunpack.c.h.b16 %v725
  %v766 = vunpack.c.l.b16 %v726
  %v767 = vunpack.c.h.b16 %v726
  %v768 = vunpack.c.l.b16 %v727
  %v769 = vunpack.c.h.b16 %v727
  %v770 = vunpack.c.l.b16 %v728
  %v771 = vunpack.c.h.b16 %v728
  %v772 = vunpack.c.l.b16 %v729
  %v773 = vunpack.c.h.b16 %v729
  %v774 = vunpack.c.l.b16 %v730
  %v775 = vunpack.c.h.b16 %v730
  %v776 = vunpack.c.l.b16 %v731
  %v777 = vunpack.c.h.b16 %v731
  %v778 = vunpack.c.l.b16 %v732
  %v779 = vunpack.c.h.b16 %v732
  %v780 = vunpack.c.l.b16 %v733
  %v781 = vunpack.c.h.b16 %v733
  %v782 = vpack.c.b16 %v750, %v750
  %v783 = vpack.c.b16 %v751, %v751
  %v784 = vpack.c.b16 %v752, %v752
  %v785 = vpack.c.b16 %v753, %v753
  %v786 = vpack.c.b16 %v754, %v754
  %v787 = vpack.c.b16 %v755, %v755
  %v788 = vpack.c.b16 %v756, %v756
  %v789 = vpack.c.b16 %v757, %v757
  %v790 = vpack.c.b16 %v758, %v758
  %v791 = vpack.c.b16 %v759, %v759
  %v792 = vpack.c.b16 %v760, %v760
  %v793 = vpack.c.b16 %v761, %v761
  %v794 = vpack.c.b16 %v762, %v762
  %v795 = vpack.c.b16 %v763, %v763
  %v796 = vpack.c.b16 %v764, %v764
  %v797 = vpack.c.b16 %v765, %v765
  %v798 = vpack.c.b16 %v766, %v766
  %v799 = vpack.c.b16 %v767, %v767
  %v800 = vpack.c.b16 %v768, %v768
  %v801 = vpack.c.b16 %v769, %v769
  %v802 = vpack.c.b16 %v770, %v770
  %v803 = vpack.c.b16 %v771, %v771
  %v804 = vpack.c.b16 %v772, %v772
  %v805 = vpack.c.b16 %v773, %v773
  %v806 = vpack.c.b16 %v774, %v774
  %v807 = vpack.c.b16 %v775, %v775
  %v808 = vpack.c.b16 %v776, %v776
  %v809 = vpack.c.b16 %v777, %v777
  %v810 = vpack.c.b16 %v778, %v778
  %v811 = vpack.c.b16 %v779, %v779
  %v812 = vpack.c.b16 %v780, %v780
  %v813 = vpack.c.b16 %v781, %v781
  %vm846 = vcmask 257024
  %847 = vst.msk [vmem:[%s4] sm:$0xf] %vm846, %v782
  %848 = vst.msk [vmem:[%s4 + $0x4] sm:$0xf] %vm846, %v783
  %849 = vst.msk [vmem:[%s4 + $0x8] sm:$0xf] %vm846, %v784
  %850 = vst.msk [vmem:[%s4 + $0xc] sm:$0xf] %vm846, %v785
  %851 = vst.msk [vmem:[%s4 + $0x10] sm:$0xf] %vm846, %v786
  %852 = vst.msk [vmem:[%s4 + $0x14] sm:$0xf] %vm846, %v787
  %853 = vst.msk [vmem:[%s4 + $0x18] sm:$0xf] %vm846, %v788
  %854 = vst.msk [vmem:[%s4 + $0x1c] sm:$0xf] %vm846, %v789
  %855 = vst.msk [vmem:[%s4 + $0x20] sm:$0xf] %vm846, %v790
  %856 = vst.msk [vmem:[%s4 + $0x24] sm:$0xf] %vm846, %v791
  %857 = vst.msk [vmem:[%s4 + $0x28] sm:$0xf] %vm846, %v792
  %858 = vst.msk [vmem:[%s4 + $0x2c] sm:$0xf] %vm846, %v793
  %859 = vst.msk [vmem:[%s4 + $0x30] sm:$0xf] %vm846, %v794
  %860 = vst.msk [vmem:[%s4 + $0x34] sm:$0xf] %vm846, %v795
  %861 = vst.msk [vmem:[%s4 + $0x38] sm:$0xf] %vm846, %v796
  %862 = vst.msk [vmem:[%s4 + $0x3c] sm:$0xf] %vm846, %v797
  %863 = vst.msk [vmem:[%s4 + $0x40] sm:$0xf] %vm846, %v798
  %864 = vst.msk [vmem:[%s4 + $0x44] sm:$0xf] %vm846, %v799
  %865 = vst.msk [vmem:[%s4 + $0x48] sm:$0xf] %vm846, %v800
  %866 = vst.msk [vmem:[%s4 + $0x4c] sm:$0xf] %vm846, %v801
  %867 = vst.msk [vmem:[%s4 + $0x50] sm:$0xf] %vm846, %v802
  %868 = vst.msk [vmem:[%s4 + $0x54] sm:$0xf] %vm846, %v803
  %869 = vst.msk [vmem:[%s4 + $0x58] sm:$0xf] %vm846, %v804
  %870 = vst.msk [vmem:[%s4 + $0x5c] sm:$0xf] %vm846, %v805
  %871 = vst.msk [vmem:[%s4 + $0x60] sm:$0xf] %vm846, %v806
  %872 = vst.msk [vmem:[%s4 + $0x64] sm:$0xf] %vm846, %v807
  %873 = vst.msk [vmem:[%s4 + $0x68] sm:$0xf] %vm846, %v808
  %874 = vst.msk [vmem:[%s4 + $0x6c] sm:$0xf] %vm846, %v809
  %875 = vst.msk [vmem:[%s4 + $0x70] sm:$0xf] %vm846, %v810
  %876 = vst.msk [vmem:[%s4 + $0x74] sm:$0xf] %vm846, %v811
  %877 = vst.msk [vmem:[%s4 + $0x78] sm:$0xf] %vm846, %v812
  %878 = vst.msk [vmem:[%s4 + $0x7c] sm:$0xf] %vm846, %v813
  // Predicated region
  $region18: #{tpu_custom_call.1} parent=0 // pred_check
    _
  $region19: #{tpu_custom_call.1} parent=0 // pred_check_branch
    %880 = sbr.rel (0) target = $region21
  $region20: #{tpu_custom_call.1} parent=0 // pred_region
    _
  $region21: #{tpu_custom_call.1} parent=0 // pred_fallthru
    _
  // Predicated region
  $region22: #{tpu_custom_call.1} parent=0 // pred_check
    _
  $region23: #{tpu_custom_call.1} parent=0 // pred_check_branch
    %882 = sbr.rel (0) target = $region25
  $region24: #{tpu_custom_call.1} parent=0 // pred_region
    _
  $region25: #{tpu_custom_call.1} parent=0 // pred_fallthru
    _
  // Predicated region
  $region26: #{tpu_custom_call.1} parent=0 // pred_check
    _
  $region27: #{tpu_custom_call.1} parent=0 // pred_check_branch
    %884 = sbr.rel (0) target = $region29
  $region28: #{tpu_custom_call.1} parent=0 // pred_region
    _
  $region29: #{tpu_custom_call.1} parent=0 // pred_fallthru
    _
  // Predicated region
  $region30: #{tpu_custom_call.1} parent=0 // pred_check
    _
  $region31: #{tpu_custom_call.1} parent=0 // pred_check_branch
    %886 = sbr.rel (0) target = $region33
  $region32: #{tpu_custom_call.1} parent=0 // pred_region
    _
  $region33: #{tpu_custom_call.1} parent=0 // pred_fallthru
    _
  // Predicated region
  $region34: #{tpu_custom_call.1} parent=0 // pred_check
    _
  $region35: #{tpu_custom_call.1} parent=0 // pred_check_branch
    %888 = sbr.rel (0) target = $region37
  $region36: #{tpu_custom_call.1} parent=0 // pred_region
    _
  $region37: #{tpu_custom_call.1} parent=0 // pred_fallthru
    _
  // Predicated region
  $region38: #{tpu_custom_call.1} parent=0 // pred_check
    _
  $region39: #{tpu_custom_call.1} parent=0 // pred_check_branch
    %890 = sbr.rel (0) target = $region41
  $region40: #{tpu_custom_call.1} parent=0 // pred_region
    _
  $region41: #{tpu_custom_call.1} parent=0 // pred_fallthru
    _

</llo_original>
